<compile_context>
chip_gen: v5e
topology: v5e:2x2
jax: 0.10.0
libtpu: 0.0.40
codegen_flags: <defaults>
</compile_context>

<pallas_src>
import jax
import jax.numpy as jnp
from jax.experimental import pallas as pl
from jax.experimental.pallas import tpu as pltpu


# ----------------------------------------------------------------------------
# Kernels
# ----------------------------------------------------------------------------
def backend_kernel(x_ref, w_ref, b_ref, o_ref, acc_ref):
    # x: [tm, tk] bf16   w: [tk, 512] bf16   b: [1, 512] f32
    # o: [tm, 512] f32   acc: [tm, 512] f32 VMEM scratch
    k = pl.program_id(1)

    @pl.when(k == 0)
    def _():
        acc_ref[...] = jnp.zeros_like(acc_ref)

    acc_ref[...] += jnp.dot(x_ref[...], w_ref[...],
                            preferred_element_type=jnp.float32)

    @pl.when(k == pl.num_programs(1) - 1)
    def _():
        o_ref[...] = jnp.maximum(acc_ref[...] + b_ref[...], 0.0)


def attn_head_kernel(f_ref, w1_ref, b1_ref, w2r_ref, b2_ref,
                     we1_ref, be1_ref, we2_ref, be2_ref,
                     age_ref, gen_ref, wc_ref, bc_ref,
                     logit_ref, pooled_ref, attn_ref):
    # f: [B, N, 512]  w1: [512,512]  b1: [1,512]  w2r: [1,512]  b2: [1,1]
    # we1: [512,128]  we2: [128,16]  age/gen: [B,1]  wc: [18,NC]  bc: [1,NC]
    B, N, H = f_ref.shape
    f = f_ref[...]                                        # [B, N, H]
    f2 = f.reshape(B * N, H)                              # row-major (B*N, H)

    # Attention MLP: Linear(512,512) + ReLU
    h = jnp.maximum(
        jnp.dot(f2, w1_ref[...], preferred_element_type=jnp.float32)
        + b1_ref[...], 0.0)
    # Score projection Linear(512,1) done on the VPU/XLU (broadcast-multiply +
    # lane reduction) instead of a 1-wide MXU output.
    s = jnp.sum(h * w2r_ref[...], axis=-1, keepdims=True) + b2_ref[...]
    s = s.reshape(B, N)

    # softmax over the view axis
    s = s - jnp.max(s, axis=-1, keepdims=True)
    e = jnp.exp(s)
    w = e / jnp.sum(e, axis=-1, keepdims=True)            # [B, N]
    attn_ref[...] = w

    # attention-weighted sum over views
    pooled = jnp.sum(f * w[:, :, None], axis=1)           # [B, 512]
    pooled_ref[...] = pooled

    # Encoder: Linear(512,128) + ReLU, Dropout(p=0.3) -> identity (eval)
    h1 = jnp.maximum(
        jnp.dot(pooled, we1_ref[...], preferred_element_type=jnp.float32)
        + be1_ref[...], 0.0)
    # Linear(128,16) + ReLU, Dropout(p=0.3) -> identity (eval)
    h2 = jnp.maximum(
        jnp.dot(h1, we2_ref[...], preferred_element_type=jnp.float32)
        + be2_ref[...], 0.0)

    # classifier over cat([h2, age, gender], dim=1) folded into three terms
    logits = jnp.dot(h2, wc_ref[0:16, :], preferred_element_type=jnp.float32)
    logits = logits + age_ref[...] * wc_ref[16:17, :]
    logits = logits + gen_ref[...] * wc_ref[17:18, :]
    logit_ref[...] = logits + bc_ref[...]


# ----------------------------------------------------------------------------
# Wrappers
# ----------------------------------------------------------------------------
def _round_up(n, m):
    return (n + m - 1) // m * m


def _full_spec(shape):
    return pl.BlockSpec(shape, lambda i: (0,) * len(shape))


def backend_forward(x_flat, w, b, *, tm_max=256, tk_max=2048):
    """Tiled bf16 GEMM + bias + ReLU.  x_flat: [R, D], w: [D, 512], b: [1, 512].

    Tiles are sized so double-buffered (x_tile + w_tile) stays well under the
    scoped-VMEM defaults of every generation (16 MiB v5e / 32 MiB v6e / v7x).
    """
    R, D = x_flat.shape
    Hout = w.shape[1]

    # Row (M) tiling: pad to a multiple of 8 sublanes, tile at <=256 rows.
    tm = min(tm_max, _round_up(R, 8))
    R_pad = _round_up(R, tm)
    # Contraction (K) tiling: lane-aligned, <= tk_max.
    tk = min(tk_max, _round_up(D, 128))
    D_pad = _round_up(D, tk)

    x_p = jnp.zeros((R_pad, D_pad), jnp.bfloat16)
    x_p = x_p.at[:R, :D].set(x_flat.astype(jnp.bfloat16))
    w_p = jnp.zeros((D_pad, Hout), jnp.bfloat16)
    w_p = w_p.at[:D, :].set(w.astype(jnp.bfloat16))
    b = b.astype(jnp.float32)

    grid = (R_pad // tm, D_pad // tk)

    out = pl.pallas_call(
        backend_kernel,
        out_shape=jax.ShapeDtypeStruct((R_pad, Hout), jnp.float32),
        grid=grid,
        in_specs=[
            pl.BlockSpec((tm, tk), lambda i, k: (i, k)),
            pl.BlockSpec((tk, Hout), lambda i, k: (k, 0)),
            pl.BlockSpec((1, Hout), lambda i, k: (0, 0)),
        ],
        out_specs=pl.BlockSpec((tm, Hout), lambda i, k: (i, 0)),
        scratch_shapes=[pltpu.VMEM((tm, Hout), jnp.float32)],
        compiler_params=pltpu.CompilerParams(
            dimension_semantics=("parallel", "arbitrary"),
            vmem_limit_bytes=32 * 1024 * 1024,
        ),
        cost_estimate=pl.CostEstimate(
            flops=2 * R_pad * D_pad * Hout,
            transcendentals=0,
            bytes_accessed=R_pad * D_pad * 2 + D_pad * Hout * 2
                           + R_pad * Hout * 4,
        ),
    )(x_p, w_p, b)
    return out[:R]


def attn_head_forward(feats, a_w1, a_b1, a_w2, a_b2,
                      e_w1, e_b1, e_w2, e_b2, age, gender, c_w, c_b):
    """Fused attention pooling + encoder + classifier (single pallas_call)."""
    B, N, H = feats.shape
    nc = c_w.shape[1]
    w2_row = a_w2.reshape(1, H)   # [512,1] -> [1,512] for VPU broadcast-mul

    logits, pooled, attn_w = pl.pallas_call(
        attn_head_kernel,
        out_shape=(jax.ShapeDtypeStruct((B, nc), jnp.float32),
                   jax.ShapeDtypeStruct((B, H), jnp.float32),
                   jax.ShapeDtypeStruct((B, N), jnp.float32)),
        grid=(1,),
        in_specs=[_full_spec((B, N, H)),
                  _full_spec((H, H)), _full_spec((1, H)),
                  _full_spec((1, H)), _full_spec((1, 1)),
                  _full_spec((H, 128)), _full_spec((1, 128)),
                  _full_spec((128, 16)), _full_spec((1, 16)),
                  _full_spec((B, 1)), _full_spec((B, 1)),
                  _full_spec((18, nc)), _full_spec((1, nc))],
        out_specs=(_full_spec((B, nc)), _full_spec((B, H)),
                   _full_spec((B, N))),
    )(feats, a_w1, a_b1, w2_row, a_b2,
      e_w1, e_b1, e_w2, e_b2, age, gender, c_w, c_b)
    return logits, pooled, attn_w


def vgg_with_attn_forward(x, age, gender, channel, params, return_attn=False):
    # `channel` must be static host-side values (Python ints), so that
    # x[:, :max(channel)] is a static slice and the wrapper stays jit-able
    # (matches the PyTorch reference: global slice to max(channel), no
    # per-sample view masking).
    C = int(max(int(c) for c in channel))
    x = x[:, :C]                                   # [B, C, 3, H, W]
    B = x.shape[0]
    D = x.shape[2] * x.shape[3] * x.shape[4]

    # backend on every view: flatten each x[:, i] and run one tiled GEMM
    x_flat = x.reshape(B * C, D)
    feats = backend_forward(x_flat, params["bk_w"], params["bk_b"])  # [B*C,512]
    feats = feats.reshape(B, C, 512)               # torch.stack(outputs, dim=1)

    # fused attention pooling + encoder + classifier
    logits, f_mean, attn_w = attn_head_forward(
        feats,
        params["a_w1"], params["a_b1"], params["a_w2"], params["a_b2"],
        params["e_w1"], params["e_b1"], params["e_w2"], params["e_b2"],
        age.reshape(-1, 1).astype(jnp.float32),
        gender.reshape(-1, 1).astype(jnp.float32),
        params["c_w"], params["c_b"])

    if return_attn:
        return logits, f_mean, attn_w
    return logits, f_mean


# ----------------------------------------------------------------------------
# Deterministic parameter construction
# ----------------------------------------------------------------------------
def make_params(key, img_dim, num_classes):
    ks = jax.random.split(key, 12)
    s = 0.02
    return {
        # synthetic backend stub: Linear(img_dim, 512), weights bf16 at rest
        # TODO(synk): real VGG `backend` is an external module; stubbed here.
        "bk_w": (s * jax.random.normal(ks[0], (img_dim, 512), jnp.float32)
                 ).astype(jnp.bfloat16),
        "bk_b": s * jax.random.normal(ks[1], (1, 512), jnp.float32),
        # Attention: Linear(512,512), Linear(512,1)   (stored as [in, out])
        "a_w1": s * jax.random.normal(ks[2], (512, 512), jnp.float32),
        "a_b1": s * jax.random.normal(ks[3], (1, 512), jnp.float32),
        "a_w2": s * jax.random.normal(ks[4], (512, 1), jnp.float32),
        "a_b2": s * jax.random.normal(ks[5], (1, 1), jnp.float32),
        # Encoder: Linear(512,128), Linear(128,16)
        "e_w1": s * jax.random.normal(ks[6], (512, 128), jnp.float32),
        "e_b1": s * jax.random.normal(ks[7], (1, 128), jnp.float32),
        "e_w2": s * jax.random.normal(ks[8], (128, 16), jnp.float32),
        "e_b2": s * jax.random.normal(ks[9], (1, 16), jnp.float32),
        # Classifier: Linear(16 + 2, num_classes)
        "c_w": s * jax.random.normal(ks[10], (18, num_classes), jnp.float32),
        "c_b": s * jax.random.normal(ks[11], (1, num_classes), jnp.float32),
    }


if __name__ == "__main__":
    key = jax.random.PRNGKey(0)
    k_x, k_a, k_g, k_p = jax.random.split(key, 4)

    B, C_total, H, W = 2, 5, 8, 8
    num_classes = 3
    img_dim = 3 * H * W

    x = jax.random.normal(k_x, (B, C_total, 3, H, W), jnp.float32)
    age = jax.random.uniform(k_a, (B,), jnp.float32)
    gender = (jax.random.uniform(k_g, (B,)) > 0.5).astype(jnp.float32)
    channel = [4, 3]          # static per-sample view counts; max -> 4 views

    params = make_params(k_p, img_dim, num_classes)

    logits, f_mean = vgg_with_attn_forward(x, age, gender, channel, params)
    jax.block_until_ready((logits, f_mean))

    assert logits.shape == (B, num_classes)
    assert f_mean.shape == (B, 512)

    # return_attn path
    logits2, f_mean2, attn_w = vgg_with_attn_forward(
        x, age, gender, channel, params, return_attn=True)
    jax.block_until_ready((logits2, f_mean2, attn_w))
    assert attn_w.shape == (B, 4)

    print("KERNEL_OK")
</pallas_src>

<mosaic_0001>
module attributes {stable_mosaic.version = 11 : i64} {
  func.func @backend_kernel(%arg0: i32, %arg1: i32, %arg2: memref<8x256xbf16, #tpu.memory_space<vmem>>, %arg3: memref<256x512xbf16, #tpu.memory_space<vmem>>, %arg4: memref<1x512xf32, #tpu.memory_space<vmem>>, %arg5: memref<8x512xf32, #tpu.memory_space<vmem>>, %arg6: memref<8x512xf32, #tpu.memory_space<vmem>>) attributes {dimension_semantics = [#tpu.dimension_semantics<parallel>, #tpu.dimension_semantics<arbitrary>], iteration_bounds = array<i64: 1, 1>, scalar_prefetch = 0 : i64, scratch_operands = 1 : i64, tpu.core_type = #tpu.core_type<tc>, window_params = [{transform_indices = @transform_0, window_bounds = array<i64: 8, 256>}, {transform_indices = @transform_1, window_bounds = array<i64: 256, 512>}, {pipeline_mode = #tpu.pipeline_mode<synchronous>, transform_indices = @transform_2, window_bounds = array<i64: 1, 512>}, {transform_indices = @transform_3, window_bounds = array<i64: 8, 512>}]} {
    %c0_i32 = arith.constant 0 : i32
    %0 = arith.cmpi eq, %arg1, %c0_i32 : i32
    %1 = arith.extui %0 : i1 to i32
    %c0_i32_0 = arith.constant 0 : i32
    %2 = arith.cmpi ne, %1, %c0_i32_0 : i32
    scf.if %2 {
      %cst_10 = arith.constant 0.000000e+00 : f32
      %12 = vector.broadcast %cst_10 : f32 to vector<8x512xf32>
      %c0_11 = arith.constant 0 : index
      %c0_12 = arith.constant 0 : index
      %13 = vector.load %arg6[%c0_11, %c0_12] : memref<8x512xf32, #tpu.memory_space<vmem>>, vector<8x512xf32>
      tpu.vector_store %arg6[%c0_11, %c0_12], %12 {strides = array<i32>} : memref<8x512xf32, #tpu.memory_space<vmem>>, vector<8x512xf32>,
    } else {
    }
    %c0 = arith.constant 0 : index
    %c0_1 = arith.constant 0 : index
    %3 = vector.load %arg6[%c0, %c0_1] : memref<8x512xf32, #tpu.memory_space<vmem>>, vector<8x512xf32>
    %c0_2 = arith.constant 0 : index
    %c0_3 = arith.constant 0 : index
    %4 = vector.load %arg2[%c0_2, %c0_3] : memref<8x256xbf16, #tpu.memory_space<vmem>>, vector<8x256xbf16>
    %c0_4 = arith.constant 0 : index
    %c0_5 = arith.constant 0 : index
    %5 = vector.load %arg3[%c0_4, %c0_5] : memref<256x512xbf16, #tpu.memory_space<vmem>>, vector<256x512xbf16>
    %cst = arith.constant dense<0.000000e+00> : vector<8x512xf32>
    %6 = tpu.matmul %4, %5, %cst {dimension_numbers = #tpu.dot_dimension_numbers<[1], [0], [0], [1], [0, 0, 1, 1], [], []>} : vector<8x256xbf16>, vector<256x512xbf16>, vector<8x512xf32> -> vector<8x512xf32>
    %7 = arith.addf %3, %6 : vector<8x512xf32>
    %c0_6 = arith.constant 0 : index
    %c0_7 = arith.constant 0 : index
    %8 = vector.load %arg6[%c0_6, %c0_7] : memref<8x512xf32, #tpu.memory_space<vmem>>, vector<8x512xf32>
    tpu.vector_store %arg6[%c0_6, %c0_7], %7 {strides = array<i32>} : memref<8x512xf32, #tpu.memory_space<vmem>>, vector<8x512xf32>,
    %c0_i32_8 = arith.constant 0 : i32
    %9 = arith.cmpi eq, %arg1, %c0_i32_8 : i32
    %10 = arith.extui %9 : i1 to i32
    %c0_i32_9 = arith.constant 0 : i32
    %11 = arith.cmpi ne, %10, %c0_i32_9 : i32
    scf.if %11 {
      %c0_10 = arith.constant 0 : index
      %c0_11 = arith.constant 0 : index
      %12 = vector.load %arg6[%c0_10, %c0_11] : memref<8x512xf32, #tpu.memory_space<vmem>>, vector<8x512xf32>
      %c0_12 = arith.constant 0 : index
      %c0_13 = arith.constant 0 : index
      %13 = vector.load %arg4[%c0_12, %c0_13] : memref<1x512xf32, #tpu.memory_space<vmem>>, vector<1x512xf32>
      %14 = vector.broadcast %13 : vector<1x512xf32> to vector<8x512xf32>
      %15 = arith.addf %12, %14 : vector<8x512xf32>
      %cst_14 = arith.constant 0.000000e+00 : f32
      %16 = vector.broadcast %cst_14 : f32 to vector<8x512xf32>
      %17 = arith.maximumf %15, %16 : vector<8x512xf32>
      %c0_15 = arith.constant 0 : index
      %c0_16 = arith.constant 0 : index
      %18 = vector.load %arg5[%c0_15, %c0_16] : memref<8x512xf32, #tpu.memory_space<vmem>>, vector<8x512xf32>
      tpu.vector_store %arg5[%c0_15, %c0_16], %17 {strides = array<i32>} : memref<8x512xf32, #tpu.memory_space<vmem>>, vector<8x512xf32>,
    } else {
    }
    return
  }
  func.func @transform_0(%arg0: i32, %arg1: i32) -> (i32, i32) {
    %c0_i32 = arith.constant 0 : i32
    return %arg0, %arg1 : i32, i32
  }
  func.func @transform_1(%arg0: i32, %arg1: i32) -> (i32, i32) {
    %c0_i32 = arith.constant 0 : i32
    %c0_i32_0 = arith.constant 0 : i32
    return %arg1, %c0_i32 : i32, i32
  }
  func.func @transform_2(%arg0: i32, %arg1: i32) -> (i32, i32) {
    %c0_i32 = arith.constant 0 : i32
    %c0_i32_0 = arith.constant 0 : i32
    %c0_i32_1 = arith.constant 0 : i32
    return %c0_i32, %c0_i32_0 : i32, i32
  }
  func.func @transform_3(%arg0: i32, %arg1: i32) -> (i32, i32) {
    %c0_i32 = arith.constant 0 : i32
    %c0_i32_0 = arith.constant 0 : i32
    return %arg0, %c0_i32 : i32, i32
  }
}

</mosaic_0001>

<llo_original>
// kernel: tpu_custom_call.1
$region0: #{tpu_custom_call.1}
  #allocation0 [shape = 'u32[]', space=smem, size = 0x4, offset = 0x4, fixed_abs, tag = 'smem constant byte address 0x4 - core index']
  #allocation1 [shape = 'u32[72,128]{1,0:T(1,128)}', space=vmem, size = 0x9000, scoped, tag = 'internal scratch']
  #allocation2 [shape = 'f32[8,512]{1,0:T(8,128)}', space=vmem, size = 0x4000, scoped, tag = 'scratch operand']
  %s0 = inlined_call_operand.hbm [shape: bf16[8,256], index: 0, kind: input, shape index: {}]
  %s1 = inlined_call_operand.hbm [shape: bf16[256,512], index: 1, kind: input, shape index: {}]
  %s2 = inlined_call_operand.hbm [shape: f32[1,512], index: 2, kind: input, shape index: {}]
  %s3 = inlined_call_operand.hbm [shape: f32[8,512], index: 3, kind: output, shape index: {}]
  %s4 = sld [smem:[#allocation0]]
  $region42: #{tpu_custom_call.1} parent=0
    _
  %s6 = ssub.s32 1, %s4
  %s7 = scalar_select 0, %s6, %s4
  $region1: #{tpu_custom_call.1} parent=0
    #allocation3 [shape = 'u8[4096]{0}', space=vmem, size = 0x1000, scoped, tag = 'input window, operand 0, single buffered']
    #allocation4 [shape = 's32[1]{0}', space=sflag, size = 0x4, scoped, tag = 'scoped memory for tpu_custom_call.1']
    #allocation5 [shape = 's32[1]{0}', space=sflag, size = 0x4, scoped, tag = 'scoped memory for tpu_custom_call.1']
    #allocation6 [shape = 'u8[262144]{0}', space=vmem, size = 0x40000, scoped, tag = 'input window, operand 1, single buffered']
    #allocation7 [shape = 's32[1]{0}', space=sflag, size = 0x4, scoped, tag = 'scoped memory for tpu_custom_call.1']
    #allocation8 [shape = 'u8[2048]{0}', space=vmem, size = 0x800, scoped, tag = 'input window, operand 2, single buffered']
    #allocation9 [shape = 'u8[16384]{0}', space=vmem, size = 0x4000, scoped, tag = 'output window, operand 0, single buffered']
    %8 = vsyncpa [#allocation4], 0
    %9 = vsyncpa [#allocation7], 0
    %10 = vsyncpa [#allocation5], 0
    // Predicated region
    $region2: #{tpu_custom_call.1} parent=1 // pred_check
      _
    $region3: #{tpu_custom_call.1} parent=1 // pred_check_branch
      %12 = sbr.rel (0) target = $region5
    $region4: #{tpu_custom_call.1} parent=1 // pred_region
      %14 = vsyncadd [#allocation4], 0
      %s16 = sshll.u32 %s0, 4
      %s17 = int_to_ptr.hbm [resolvable:$true] %s16
      %s18 = sshll.u32 [#allocation3], 4
      %s19 = int_to_ptr.vmem [resolvable:$true] %s18
      %21 = dma.hbm_to_vmem [thread:$0]  %s17, 128, %s19, [#allocation4]
    $region5: #{tpu_custom_call.1} parent=1 // pred_fallthru
      _
    // Predicated region
    $region6: #{tpu_custom_call.1} parent=1 // pred_check
      _
    $region7: #{tpu_custom_call.1} parent=1 // pred_check_branch
      %23 = sbr.rel (0) target = $region9
    $region8: #{tpu_custom_call.1} parent=1 // pred_region
      %25 = vsyncadd [#allocation7], 0
      %s26 = sshll.u32 %s1, 4
      %s27 = int_to_ptr.hbm [resolvable:$true] %s26
      %s28 = sshll.u32 [#allocation6], 4
      %s29 = int_to_ptr.vmem [resolvable:$true] %s28
      %34 = dma.hbm_to_vmem [thread:$0]  %s27, 8192, %s29, [#allocation7], 256, 256, 16
    $region9: #{tpu_custom_call.1} parent=1 // pred_fallthru
      _
    // Predicated region
    $region10: #{tpu_custom_call.1} parent=1 // pred_check
      _
    $region11: #{tpu_custom_call.1} parent=1 // pred_check_branch
      %36 = sbr.rel (0) target = $region13
    $region12: #{tpu_custom_call.1} parent=1 // pred_region
      %38 = vsyncadd [#allocation7], 0
      %s40 = sshll.u32 %s2, 4
      %s41 = int_to_ptr.hbm [resolvable:$true] %s40
      %s42 = sshll.u32 [#allocation8], 4
      %s43 = int_to_ptr.vmem [resolvable:$true] %s42
      %45 = dma.hbm_to_vmem [thread:$0]  %s41, 64, %s43, [#allocation7]
    $region13: #{tpu_custom_call.1} parent=1 // pred_fallthru
      _
    // Predicated region
    $region14: #{tpu_custom_call.1} parent=1 // pred_check
      _
    $region15: #{tpu_custom_call.1} parent=1 // pred_check_branch
      %47 = sbr.rel (0) target = $region17
    $region16: #{tpu_custom_call.1} parent=1 // pred_region
      %49 = dma.done [#allocation4], 128
    $region17: #{tpu_custom_call.1} parent=1 // pred_fallthru
      _
    // Predicated region
    $region18: #{tpu_custom_call.1} parent=1 // pred_check
      _
    $region19: #{tpu_custom_call.1} parent=1 // pred_check_branch
      %51 = sbr.rel (0) target = $region21
    $region20: #{tpu_custom_call.1} parent=1 // pred_region
      %53 = dma.done [#allocation7], 8192
    $region21: #{tpu_custom_call.1} parent=1 // pred_fallthru
      _
    // Predicated region
    $region22: #{tpu_custom_call.1} parent=1 // pred_check
      _
    $region23: #{tpu_custom_call.1} parent=1 // pred_check_branch
      %55 = sbr.rel (0) target = $region25
    $region24: #{tpu_custom_call.1} parent=1 // pred_region
      %57 = dma.done [#allocation7], 64
    $region25: #{tpu_custom_call.1} parent=1 // pred_fallthru
      _
    %p58 = scmp.eq.s32.totalorder 0, 0
    // Predicated region
    $region26: #{tpu_custom_call.1} parent=1 // pred_check
      %p59 = pneg %p58
    $region27: #{tpu_custom_call.1} parent=1 // pred_check_branch
      %61 = sbr.rel (%p59) target = $region29
    $region28: #{tpu_custom_call.1} parent=1 // pred_region
      %62 = vst [vmem:[#allocation2] sm:$0xff] 0.0
      %63 = vst [vmem:[#allocation2 + $0x8] sm:$0xff] 0.0
      %64 = vst [vmem:[#allocation2 + $0x10] sm:$0xff] 0.0
      %65 = vst [vmem:[#allocation2 + $0x18] sm:$0xff] 0.0
    $region29: #{tpu_custom_call.1} parent=1 // pred_fallthru
      _
    %v66 = vld [vmem:[#allocation2] sm:$0xff]
    %v67 = vld [vmem:[#allocation2 + $0x8] sm:$0xff]
    %v68 = vld [vmem:[#allocation2 + $0x10] sm:$0xff]
    %v69 = vld [vmem:[#allocation2 + $0x18] sm:$0xff]
    %v70 = vld [vmem:[#allocation3] sm:$0xff]
    %v71 = vld [vmem:[#allocation6] sm:$0xff]
    %v72 = vld [vmem:[#allocation6 + $0x8] sm:$0xff]
    %v73 = vld [vmem:[#allocation6 + $0x10] sm:$0xff]
    %v74 = vld [vmem:[#allocation6 + $0x18] sm:$0xff]
    %v75 = vld [vmem:[#allocation6 + $0x20] sm:$0xff]
    %v76 = vld [vmem:[#allocation6 + $0x28] sm:$0xff]
    %v77 = vld [vmem:[#allocation6 + $0x30] sm:$0xff]
    %v78 = vld [vmem:[#allocation6 + $0x38] sm:$0xff]
    %v79 = vld [vmem:[#allocation6 + $0x40] sm:$0xff]
    %v80 = vld [vmem:[#allocation6 + $0x48] sm:$0xff]
    %v81 = vld [vmem:[#allocation6 + $0x50] sm:$0xff]
    %v82 = vld [vmem:[#allocation6 + $0x58] sm:$0xff]
    %v83 = vld [vmem:[#allocation6 + $0x60] sm:$0xff]
    %v84 = vld [vmem:[#allocation6 + $0x68] sm:$0xff]
    %v85 = vld [vmem:[#allocation6 + $0x70] sm:$0xff]
    %v86 = vld [vmem:[#allocation6 + $0x78] sm:$0xff]
    %v87 = vld [vmem:[#allocation6 + $0x80] sm:$0xff]
    %v88 = vld [vmem:[#allocation6 + $0x88] sm:$0xff]
    %v89 = vld [vmem:[#allocation6 + $0x90] sm:$0xff]
    %v90 = vld [vmem:[#allocation6 + $0x98] sm:$0xff]
    %v91 = vld [vmem:[#allocation6 + $0xa0] sm:$0xff]
    %v92 = vld [vmem:[#allocation6 + $0xa8] sm:$0xff]
    %v93 = vld [vmem:[#allocation6 + $0xb0] sm:$0xff]
    %v94 = vld [vmem:[#allocation6 + $0xb8] sm:$0xff]
    %v95 = vld [vmem:[#allocation6 + $0xc0] sm:$0xff]
    %v96 = vld [vmem:[#allocation6 + $0xc8] sm:$0xff]
    %v97 = vld [vmem:[#allocation6 + $0xd0] sm:$0xff]
    %v98 = vld [vmem:[#allocation6 + $0xd8] sm:$0xff]
    %v99 = vld [vmem:[#allocation6 + $0xe0] sm:$0xff]
    %v100 = vld [vmem:[#allocation6 + $0xe8] sm:$0xff]
    %v101 = vld [vmem:[#allocation6 + $0xf0] sm:$0xff]
    %v102 = vld [vmem:[#allocation6 + $0xf8] sm:$0xff]
    %v103 = vld [vmem:[#allocation6 + $0x100] sm:$0xff]
    %v104 = vld [vmem:[#allocation6 + $0x108] sm:$0xff]
    %v105 = vld [vmem:[#allocation6 + $0x110] sm:$0xff]
    %v106 = vld [vmem:[#allocation6 + $0x118] sm:$0xff]
    %v107 = vld [vmem:[#allocation6 + $0x120] sm:$0xff]
    %v108 = vld [vmem:[#allocation6 + $0x128] sm:$0xff]
    %v109 = vld [vmem:[#allocation6 + $0x130] sm:$0xff]
    %v110 = vld [vmem:[#allocation6 + $0x138] sm:$0xff]
    %v111 = vld [vmem:[#allocation6 + $0x140] sm:$0xff]
    %v112 = vld [vmem:[#allocation6 + $0x148] sm:$0xff]
    %v113 = vld [vmem:[#allocation6 + $0x150] sm:$0xff]
    %v114 = vld [vmem:[#allocation6 + $0x158] sm:$0xff]
    %v115 = vld [vmem:[#allocation6 + $0x160] sm:$0xff]
    %v116 = vld [vmem:[#allocation6 + $0x168] sm:$0xff]
    %v117 = vld [vmem:[#allocation6 + $0x170] sm:$0xff]
    %v118 = vld [vmem:[#allocation6 + $0x178] sm:$0xff]
    %v119 = vld [vmem:[#allocation6 + $0x180] sm:$0xff]
    %v120 = vld [vmem:[#allocation6 + $0x188] sm:$0xff]
    %v121 = vld [vmem:[#allocation6 + $0x190] sm:$0xff]
    %v122 = vld [vmem:[#allocation6 + $0x198] sm:$0xff]
    %v123 = vld [vmem:[#allocation6 + $0x1a0] sm:$0xff]
    %v124 = vld [vmem:[#allocation6 + $0x1a8] sm:$0xff]
    %v125 = vld [vmem:[#allocation6 + $0x1b0] sm:$0xff]
    %v126 = vld [vmem:[#allocation6 + $0x1b8] sm:$0xff]
    %v127 = vld [vmem:[#allocation6 + $0x1c0] sm:$0xff]
    %v128 = vld [vmem:[#allocation6 + $0x1c8] sm:$0xff]
    %v129 = vld [vmem:[#allocation6 + $0x1d0] sm:$0xff]
    %v130 = vld [vmem:[#allocation6 + $0x1d8] sm:$0xff]
    %v131 = vld [vmem:[#allocation6 + $0x1e0] sm:$0xff]
    %v132 = vld [vmem:[#allocation6 + $0x1e8] sm:$0xff]
    %v133 = vld [vmem:[#allocation6 + $0x1f0] sm:$0xff]
    %v134 = vld [vmem:[#allocation6 + $0x1f8] sm:$0xff]
    %v136 = vunpack.c.l.b16 %v70
    %v137 = vunpack.c.h.b16 %v70
    %v138 = vpack.c.b16 %v136, %v136
    %v139 = vpack.c.b16 %v137, %v137
    %v206 = vunpack.c.l.b16 %v71
    %v207 = vunpack.c.h.b16 %v71
    %v208 = vunpack.c.l.b16 %v72
    %v209 = vunpack.c.h.b16 %v72
    %v210 = vunpack.c.l.b16 %v73
    %v211 = vunpack.c.h.b16 %v73
    %v212 = vunpack.c.l.b16 %v74
    %v213 = vunpack.c.h.b16 %v74
    %v214 = vunpack.c.l.b16 %v75
    %v215 = vunpack.c.h.b16 %v75
    %v216 = vunpack.c.l.b16 %v76
    %v217 = vunpack.c.h.b16 %v76
    %v218 = vunpack.c.l.b16 %v77
    %v219 = vunpack.c.h.b16 %v77
    %v220 = vunpack.c.l.b16 %v78
    %v221 = vunpack.c.h.b16 %v78
    %v222 = vunpack.c.l.b16 %v79
    %v223 = vunpack.c.h.b16 %v79
    %v224 = vunpack.c.l.b16 %v80
    %v225 = vunpack.c.h.b16 %v80
    %v226 = vunpack.c.l.b16 %v81
    %v227 = vunpack.c.h.b16 %v81
    %v228 = vunpack.c.l.b16 %v82
    %v229 = vunpack.c.h.b16 %v82
    %v230 = vunpack.c.l.b16 %v83
    %v231 = vunpack.c.h.b16 %v83
    %v232 = vunpack.c.l.b16 %v84
    %v233 = vunpack.c.h.b16 %v84
    %v234 = vunpack.c.l.b16 %v85
    %v235 = vunpack.c.h.b16 %v85
    %v236 = vunpack.c.l.b16 %v86
    %v237 = vunpack.c.h.b16 %v86
    %v238 = vunpack.c.l.b16 %v87
    %v239 = vunpack.c.h.b16 %v87
    %v240 = vunpack.c.l.b16 %v88
    %v241 = vunpack.c.h.b16 %v88
    %v242 = vunpack.c.l.b16 %v89
    %v243 = vunpack.c.h.b16 %v89
    %v244 = vunpack.c.l.b16 %v90
    %v245 = vunpack.c.h.b16 %v90
    %v246 = vunpack.c.l.b16 %v91
    %v247 = vunpack.c.h.b16 %v91
    %v248 = vunpack.c.l.b16 %v92
    %v249 = vunpack.c.h.b16 %v92
    %v250 = vunpack.c.l.b16 %v93
    %v251 = vunpack.c.h.b16 %v93
    %v252 = vunpack.c.l.b16 %v94
    %v253 = vunpack.c.h.b16 %v94
    %v254 = vunpack.c.l.b16 %v95
    %v255 = vunpack.c.h.b16 %v95
    %v256 = vunpack.c.l.b16 %v96
    %v257 = vunpack.c.h.b16 %v96
    %v258 = vunpack.c.l.b16 %v97
    %v259 = vunpack.c.h.b16 %v97
    %v260 = vunpack.c.l.b16 %v98
    %v261 = vunpack.c.h.b16 %v98
    %v262 = vunpack.c.l.b16 %v99
    %v263 = vunpack.c.h.b16 %v99
    %v264 = vunpack.c.l.b16 %v100
    %v265 = vunpack.c.h.b16 %v100
    %v266 = vunpack.c.l.b16 %v101
    %v267 = vunpack.c.h.b16 %v101
    %v268 = vunpack.c.l.b16 %v102
    %v269 = vunpack.c.h.b16 %v102
    %v270 = vunpack.c.l.b16 %v103
    %v271 = vunpack.c.h.b16 %v103
    %v272 = vunpack.c.l.b16 %v104
    %v273 = vunpack.c.h.b16 %v104
    %v274 = vunpack.c.l.b16 %v105
    %v275 = vunpack.c.h.b16 %v105
    %v276 = vunpack.c.l.b16 %v106
    %v277 = vunpack.c.h.b16 %v106
    %v278 = vunpack.c.l.b16 %v107
    %v279 = vunpack.c.h.b16 %v107
    %v280 = vunpack.c.l.b16 %v108
    %v281 = vunpack.c.h.b16 %v108
    %v282 = vunpack.c.l.b16 %v109
    %v283 = vunpack.c.h.b16 %v109
    %v284 = vunpack.c.l.b16 %v110
    %v285 = vunpack.c.h.b16 %v110
    %v286 = vunpack.c.l.b16 %v111
    %v287 = vunpack.c.h.b16 %v111
    %v288 = vunpack.c.l.b16 %v112
    %v289 = vunpack.c.h.b16 %v112
    %v290 = vunpack.c.l.b16 %v113
    %v291 = vunpack.c.h.b16 %v113
    %v292 = vunpack.c.l.b16 %v114
    %v293 = vunpack.c.h.b16 %v114
    %v294 = vunpack.c.l.b16 %v115
    %v295 = vunpack.c.h.b16 %v115
    %v296 = vunpack.c.l.b16 %v116
    %v297 = vunpack.c.h.b16 %v116
    %v298 = vunpack.c.l.b16 %v117
    %v299 = vunpack.c.h.b16 %v117
    %v300 = vunpack.c.l.b16 %v118
    %v301 = vunpack.c.h.b16 %v118
    %v302 = vunpack.c.l.b16 %v119
    %v303 = vunpack.c.h.b16 %v119
    %v304 = vunpack.c.l.b16 %v120
    %v305 = vunpack.c.h.b16 %v120
    %v306 = vunpack.c.l.b16 %v121
    %v307 = vunpack.c.h.b16 %v121
    %v308 = vunpack.c.l.b16 %v122
    %v309 = vunpack.c.h.b16 %v122
    %v310 = vunpack.c.l.b16 %v123
    %v311 = vunpack.c.h.b16 %v123
    %v312 = vunpack.c.l.b16 %v124
    %v313 = vunpack.c.h.b16 %v124
    %v314 = vunpack.c.l.b16 %v125
    %v315 = vunpack.c.h.b16 %v125
    %v316 = vunpack.c.l.b16 %v126
    %v317 = vunpack.c.h.b16 %v126
    %v318 = vunpack.c.l.b16 %v127
    %v319 = vunpack.c.h.b16 %v127
    %v320 = vunpack.c.l.b16 %v128
    %v321 = vunpack.c.h.b16 %v128
    %v322 = vunpack.c.l.b16 %v129
    %v323 = vunpack.c.h.b16 %v129
    %v324 = vunpack.c.l.b16 %v130
    %v325 = vunpack.c.h.b16 %v130
    %v326 = vunpack.c.l.b16 %v131
    %v327 = vunpack.c.h.b16 %v131
    %v328 = vunpack.c.l.b16 %v132
    %v329 = vunpack.c.h.b16 %v132
    %v330 = vunpack.c.l.b16 %v133
    %v331 = vunpack.c.h.b16 %v133
    %v332 = vunpack.c.l.b16 %v134
    %v333 = vunpack.c.h.b16 %v134
    %v334 = vpack.c.b16 %v210, %v206
    %v335 = vpack.c.b16 %v211, %v207
    %v336 = vpack.c.b16 %v212, %v208
    %v337 = vpack.c.b16 %v213, %v209
    %v338 = vpack.c.b16 %v218, %v214
    %v339 = vpack.c.b16 %v219, %v215
    %v340 = vpack.c.b16 %v220, %v216
    %v341 = vpack.c.b16 %v221, %v217
    %v342 = vpack.c.b16 %v226, %v222
    %v343 = vpack.c.b16 %v227, %v223
    %v344 = vpack.c.b16 %v228, %v224
    %v345 = vpack.c.b16 %v229, %v225
    %v346 = vpack.c.b16 %v234, %v230
    %v347 = vpack.c.b16 %v235, %v231
    %v348 = vpack.c.b16 %v236, %v232
    %v349 = vpack.c.b16 %v237, %v233
    %v350 = vpack.c.b16 %v242, %v238
    %v351 = vpack.c.b16 %v243, %v239
    %v352 = vpack.c.b16 %v244, %v240
    %v353 = vpack.c.b16 %v245, %v241
    %v354 = vpack.c.b16 %v250, %v246
    %v355 = vpack.c.b16 %v251, %v247
    %v356 = vpack.c.b16 %v252, %v248
    %v357 = vpack.c.b16 %v253, %v249
    %v358 = vpack.c.b16 %v258, %v254
    %v359 = vpack.c.b16 %v259, %v255
    %v360 = vpack.c.b16 %v260, %v256
    %v361 = vpack.c.b16 %v261, %v257
    %v362 = vpack.c.b16 %v266, %v262
    %v363 = vpack.c.b16 %v267, %v263
    %v364 = vpack.c.b16 %v268, %v264
    %v365 = vpack.c.b16 %v269, %v265
    %v366 = vpack.c.b16 %v274, %v270
    %v367 = vpack.c.b16 %v275, %v271
    %v368 = vpack.c.b16 %v276, %v272
    %v369 = vpack.c.b16 %v277, %v273
    %v370 = vpack.c.b16 %v282, %v278
    %v371 = vpack.c.b16 %v283, %v279
    %v372 = vpack.c.b16 %v284, %v280
    %v373 = vpack.c.b16 %v285, %v281
    %v374 = vpack.c.b16 %v290, %v286
    %v375 = vpack.c.b16 %v291, %v287
    %v376 = vpack.c.b16 %v292, %v288
    %v377 = vpack.c.b16 %v293, %v289
    %v378 = vpack.c.b16 %v298, %v294
    %v379 = vpack.c.b16 %v299, %v295
    %v380 = vpack.c.b16 %v300, %v296
    %v381 = vpack.c.b16 %v301, %v297
    %v382 = vpack.c.b16 %v306, %v302
    %v383 = vpack.c.b16 %v307, %v303
    %v384 = vpack.c.b16 %v308, %v304
    %v385 = vpack.c.b16 %v309, %v305
    %v386 = vpack.c.b16 %v314, %v310
    %v387 = vpack.c.b16 %v315, %v311
    %v388 = vpack.c.b16 %v316, %v312
    %v389 = vpack.c.b16 %v317, %v313
    %v390 = vpack.c.b16 %v322, %v318
    %v391 = vpack.c.b16 %v323, %v319
    %v392 = vpack.c.b16 %v324, %v320
    %v393 = vpack.c.b16 %v325, %v321
    %v394 = vpack.c.b16 %v330, %v326
    %v395 = vpack.c.b16 %v331, %v327
    %v396 = vpack.c.b16 %v332, %v328
    %v397 = vpack.c.b16 %v333, %v329
    %462 = vmatpush.bf16.msra.mxu0 %v362
    %463 = vmatpush.bf16.msra.mxu0 %v358
    %464 = vmatpush.bf16.msra.mxu0 %v354
    %465 = vmatpush.bf16.msra.mxu0 %v350
    %466 = vmatpush.bf16.msra.mxu0 %v346
    %467 = vmatpush.bf16.msra.mxu0 %v342
    %468 = vmatpush.bf16.msra.mxu0 %v338
    %469 = vmatpush.bf16.msra.mxu0 %v334
    %470 = vmatmul.bf16.gmra.mxu0 %v138
    %v471 = vpop.f32.mrf.mxu0
    %v472 = vadd.f32 0.0, %v471
    %v473 = vpop.f32.mrf.mxu0
    %474 = vdwg.mxu0
    %475 = vmatpush.bf16.msra.mxu0 %v394
    %476 = vmatpush.bf16.msra.mxu0 %v390
    %477 = vmatpush.bf16.msra.mxu0 %v386
    %478 = vmatpush.bf16.msra.mxu0 %v382
    %479 = vmatpush.bf16.msra.mxu0 %v378
    %480 = vmatpush.bf16.msra.mxu0 %v374
    %481 = vmatpush.bf16.msra.mxu0 %v370
    %482 = vmatpush.bf16.msra.mxu0 %v366
    %483 = vmatmul.bf16.gmra.mxu0 %v139
    %v484 = vpop.f32.mrf.mxu0
    %v485 = vadd.f32 %v472, %v484
    %v486 = vpop.f32.mrf.mxu0
    %487 = vdwg.mxu0
    %488 = vmatpush.bf16.msra.mxu0 %v363
    %489 = vmatpush.bf16.msra.mxu0 %v359
    %490 = vmatpush.bf16.msra.mxu0 %v355
    %491 = vmatpush.bf16.msra.mxu0 %v351
    %492 = vmatpush.bf16.msra.mxu0 %v347
    %493 = vmatpush.bf16.msra.mxu0 %v343
    %494 = vmatpush.bf16.msra.mxu0 %v339
    %495 = vmatpush.bf16.msra.mxu0 %v335
    %496 = vmatmul.bf16.gmra.mxu0 %v138
    %v497 = vpop.f32.mrf.mxu0
    %v498 = vadd.f32 0.0, %v497
    %v499 = vpop.f32.mrf.mxu0
    %500 = vdwg.mxu0
    %501 = vmatpush.bf16.msra.mxu0 %v395
    %502 = vmatpush.bf16.msra.mxu0 %v391
    %503 = vmatpush.bf16.msra.mxu0 %v387
    %504 = vmatpush.bf16.msra.mxu0 %v383
    %505 = vmatpush.bf16.msra.mxu0 %v379
    %506 = vmatpush.bf16.msra.mxu0 %v375
    %507 = vmatpush.bf16.msra.mxu0 %v371
    %508 = vmatpush.bf16.msra.mxu0 %v367
    %509 = vmatmul.bf16.gmra.mxu0 %v139
    %v510 = vpop.f32.mrf.mxu0
    %v511 = vadd.f32 %v498, %v510
    %v512 = vpop.f32.mrf.mxu0
    %513 = vdwg.mxu0
    %514 = vmatpush.bf16.msra.mxu0 %v364
    %515 = vmatpush.bf16.msra.mxu0 %v360
    %516 = vmatpush.bf16.msra.mxu0 %v356
    %517 = vmatpush.bf16.msra.mxu0 %v352
    %518 = vmatpush.bf16.msra.mxu0 %v348
    %519 = vmatpush.bf16.msra.mxu0 %v344
    %520 = vmatpush.bf16.msra.mxu0 %v340
    %521 = vmatpush.bf16.msra.mxu0 %v336
    %522 = vmatmul.bf16.gmra.mxu0 %v138
    %v523 = vpop.f32.mrf.mxu0
    %v524 = vadd.f32 0.0, %v523
    %v525 = vpop.f32.mrf.mxu0
    %526 = vdwg.mxu0
    %527 = vmatpush.bf16.msra.mxu0 %v396
    %528 = vmatpush.bf16.msra.mxu0 %v392
    %529 = vmatpush.bf16.msra.mxu0 %v388
    %530 = vmatpush.bf16.msra.mxu0 %v384
    %531 = vmatpush.bf16.msra.mxu0 %v380
    %532 = vmatpush.bf16.msra.mxu0 %v376
    %533 = vmatpush.bf16.msra.mxu0 %v372
    %534 = vmatpush.bf16.msra.mxu0 %v368
    %535 = vmatmul.bf16.gmra.mxu0 %v139
    %v536 = vpop.f32.mrf.mxu0
    %v537 = vadd.f32 %v524, %v536
    %v538 = vpop.f32.mrf.mxu0
    %539 = vdwg.mxu0
    %540 = vmatpush.bf16.msra.mxu0 %v365
    %541 = vmatpush.bf16.msra.mxu0 %v361
    %542 = vmatpush.bf16.msra.mxu0 %v357
    %543 = vmatpush.bf16.msra.mxu0 %v353
    %544 = vmatpush.bf16.msra.mxu0 %v349
    %545 = vmatpush.bf16.msra.mxu0 %v345
    %546 = vmatpush.bf16.msra.mxu0 %v341
    %547 = vmatpush.bf16.msra.mxu0 %v337
    %548 = vmatmul.bf16.gmra.mxu0 %v138
    %v549 = vpop.f32.mrf.mxu0
    %v550 = vadd.f32 0.0, %v549
    %v551 = vpop.f32.mrf.mxu0
    %552 = vdwg.mxu0
    %553 = vmatpush.bf16.msra.mxu0 %v397
    %554 = vmatpush.bf16.msra.mxu0 %v393
    %555 = vmatpush.bf16.msra.mxu0 %v389
    %556 = vmatpush.bf16.msra.mxu0 %v385
    %557 = vmatpush.bf16.msra.mxu0 %v381
    %558 = vmatpush.bf16.msra.mxu0 %v377
    %559 = vmatpush.bf16.msra.mxu0 %v373
    %560 = vmatpush.bf16.msra.mxu0 %v369
    %561 = vmatmul.bf16.gmra.mxu0 %v139
    %v562 = vpop.f32.mrf.mxu0
    %v563 = vadd.f32 %v550, %v562
    %v564 = vpop.f32.mrf.mxu0
    %565 = vdwg.mxu0
    %v566 = vadd.f32 %v66, %v485
    %v567 = vadd.f32 %v67, %v511
    %v568 = vadd.f32 %v68, %v537
    %v569 = vadd.f32 %v69, %v563
    %570 = vst [vmem:[#allocation2] sm:$0xff] %v566
    %571 = vst [vmem:[#allocation2 + $0x8] sm:$0xff] %v567
    %572 = vst [vmem:[#allocation2 + $0x10] sm:$0xff] %v568
    %573 = vst [vmem:[#allocation2 + $0x18] sm:$0xff] %v569
    // Predicated region
    $region30: #{tpu_custom_call.1} parent=1 // pred_check
      %p574 = pneg %p58
    $region31: #{tpu_custom_call.1} parent=1 // pred_check_branch
      %576 = sbr.rel (%p574) target = $region33
    $region32: #{tpu_custom_call.1} parent=1 // pred_region
      %v577 = vld [vmem:[#allocation2] sm:$0xff]
      %v578 = vld [vmem:[#allocation2 + $0x8] sm:$0xff]
      %v579 = vld [vmem:[#allocation2 + $0x10] sm:$0xff]
      %v580 = vld [vmem:[#allocation2 + $0x18] sm:$0xff]
      %v581 = vld [vmem:[#allocation8] sm:$0xf]
      %v583 = vperm.slane %v581, 0
      %v584 = vperm.slane %v581, 1
      %v585 = vperm.slane %v581, 2
      %v586 = vperm.slane %v581, 3
      %v591 = vadd.f32 %v577, %v583
      %v592 = vadd.f32 %v578, %v584
      %v593 = vadd.f32 %v579, %v585
      %v594 = vadd.f32 %v580, %v586
      %v595 = vmax.f32 %v591, 0.0
      %v596 = vmax.f32 %v592, 0.0
      %v597 = vmax.f32 %v593, 0.0
      %v598 = vmax.f32 %v594, 0.0
      %599 = vst [vmem:[#allocation9] sm:$0xff] %v595
      %600 = vst [vmem:[#allocation9 + $0x8] sm:$0xff] %v596
      %601 = vst [vmem:[#allocation9 + $0x10] sm:$0xff] %v597
      %602 = vst [vmem:[#allocation9 + $0x18] sm:$0xff] %v598
    $region33: #{tpu_custom_call.1} parent=1 // pred_fallthru
      _
    // Predicated region
    $region34: #{tpu_custom_call.1} parent=1 // pred_check
      _
    $region35: #{tpu_custom_call.1} parent=1 // pred_check_branch
      %604 = sbr.rel (0) target = $region37
    $region36: #{tpu_custom_call.1} parent=1 // pred_region
      %606 = vsyncadd [#allocation5], 0
      %s608 = sshll.u32 [#allocation9], 4
      %s609 = int_to_ptr.vmem [resolvable:$true] %s608
      %s610 = sshll.u32 %s3, 4
      %s611 = int_to_ptr.hbm [resolvable:$true] %s610
      %613 = dma.vmem_to_hbm [thread:$0]  %s609, 512, %s611, [#allocation5]
    $region37: #{tpu_custom_call.1} parent=1 // pred_fallthru
      _
    // Predicated region
    $region38: #{tpu_custom_call.1} parent=1 // pred_check
      _
    $region39: #{tpu_custom_call.1} parent=1 // pred_check_branch
      %615 = sbr.rel (0) target = $region41
    $region40: #{tpu_custom_call.1} parent=1 // pred_region
      %617 = dma.done [#allocation5], 512
    $region41: #{tpu_custom_call.1} parent=1 // pred_fallthru
      _
    %618 = vsyncpa [#allocation4], 1
    %619 = vsyncpa [#allocation7], 1
    %620 = vsyncpa [#allocation5], 1

</llo_original>
